<compile_context>
chip_gen: v7x
topology: tpu7x:2x2x1
jax: 0.10.0
libtpu: 0.0.40
codegen_flags: <defaults>
</compile_context>

<pallas_src>
import functools

import jax
import jax.numpy as jnp
from jax.experimental import pallas as pl
from jax.experimental.pallas import tpu as pltpu


def _rmsnorm_kernel(x_ref, w_ref, o_ref, *, eps):
    # x_ref: (tile_rows, hidden), w_ref: (1, hidden), o_ref: (tile_rows, hidden)
    #
    # NOTE on the ragged last grid block: Pallas pads OOB reads and masks OOB writes.
    # Padded rows feed garbage into rsqrt, which is harmless because the reduction
    # axis (hidden) is always fully in-bounds and rows are independent — do not move
    # the reduction onto a partially padded axis.
    x = x_ref[...]
    input_dtype = x.dtype
    xf = x.astype(jnp.float32)
    variance = jnp.mean(xf * xf, axis=-1, keepdims=True)
    normed = xf * jax.lax.rsqrt(variance + eps)
    # torch semantics: weight * hidden_states.to(input_dtype); jnp promotion of
    # (weight_dtype, input_dtype) matches torch's promoted multiply, and o_ref.dtype
    # is that promoted dtype, so the final astype is a no-op in the common case.
    o_ref[...] = (w_ref[...] * normed.astype(input_dtype)).astype(o_ref.dtype)


def _round_up(x, m):
    return -(-x // m) * m


def _round_down_at_least(x, m):
    return max(m, (x // m) * m)


def _num_tensorcores():
    """Best-effort count of TensorCores sharing the parallel grid (1 on v5e/v6e)."""
    try:
        kind = jax.devices()[0].device_kind.lower()
    except Exception:
        return 1
    if "lite" in kind or "v5e" in kind or "v6" in kind:
        return 1
    if "v7" in kind or "7x" in kind:
        return 2
    if "v4" in kind or "v5p" in kind:   # legacy megacore chips
        return 2
    return 1


def _vmem_capacity_bytes(num_tc):
    cap = 64 << 20  # conservative fallback (v7x per-TensorCore VMEM)
    try:
        cap = int(pltpu.get_tpu_info().vmem_capacity_bytes)
    except Exception:
        pass
    if num_tc >= 2:
        # If the query reports a per-chip figure on a 2-TC chip, clamp to per-TC.
        cap = min(cap, 64 << 20)
    return cap


def _pick_tile_rows(rows, hidden, in_bytes, out_bytes, sublane, vmem_cap, num_tc):
    # Per-row VMEM footprint: double-buffered input + output tiles, plus the two
    # full-tile f32 intermediates (xf upcast and normed) the kernel materializes.
    per_row = (2 * (in_bytes + out_bytes) + 2 * 4) * hidden
    budget = min(max(vmem_cap - (16 << 20), 16 << 20), 96 << 20)

    tile = max(sublane, budget // max(per_row, 1))

    # Bytes-based cap instead of a fixed row cap: diminishing returns once the
    # per-step input tile reaches ~8 MiB (important for hidden=512/1536 norms).
    rows_for_target = max(sublane, (8 << 20) // max(hidden * in_bytes, 1))
    tile = min(tile, rows_for_target)

    tile = min(tile, _round_up(rows, sublane))   # never bigger than the whole problem
    tile = _round_down_at_least(tile, sublane)

    # On 2-TC chips (v7x), make the parallel grid split evenly across cores with
    # balanced step sizes. On single-TC chips (v5e/v6e) extra steps are pure overhead.
    if num_tc >= 2 and rows > num_tc * sublane:
        steps = pl.cdiv(rows, tile)
        steps = _round_up(steps, num_tc)
        tile = _round_up(pl.cdiv(rows, steps), sublane)

    return _round_down_at_least(tile, sublane)


def deepseek_v2_rmsnorm(hidden_states, weight, eps=1e-6, tile_rows=None):
    """hidden_states: (..., hidden_size); weight: (hidden_size,)."""
    orig_shape = hidden_states.shape
    hidden = orig_shape[-1]
    x2d = hidden_states.reshape(-1, hidden)
    rows = x2d.shape[0]

    # Output dtype follows torch promotion of weight with input dtype.
    # (If both are bf16 the kernel multiplies in bf16 like torch; if weight is f32
    # the multiply promotes to f32 like torch.)
    out_dtype = jnp.promote_types(weight.dtype, hidden_states.dtype)
    in_bytes = jnp.dtype(hidden_states.dtype).itemsize
    out_bytes = jnp.dtype(out_dtype).itemsize
    w_bytes = jnp.dtype(weight.dtype).itemsize

    # Sublane packing: 8 rows/vreg for 32-bit, 16 for bf16, 32 for int8/fp8.
    sublane = max(8, 32 // max(in_bytes, 1))

    num_tc = _num_tensorcores()
    vmem_cap = _vmem_capacity_bytes(num_tc)
    if tile_rows is None:
        tile_rows = _pick_tile_rows(rows, hidden, in_bytes, out_bytes, sublane,
                                    vmem_cap, num_tc)

    grid = (pl.cdiv(rows, tile_rows),)

    # Scoped VMEM: double-buffered in/out tiles + f32 intermediates + weight + headroom.
    io_tile_bytes = tile_rows * hidden * (in_bytes + out_bytes)
    f32_tmp_bytes = 2 * tile_rows * hidden * 4
    needed = 2 * io_tile_bytes + f32_tmp_bytes + hidden * w_bytes + (4 << 20)
    vmem_limit = int(min(max(needed, 32 << 20), vmem_cap))

    cost = pl.CostEstimate(
        flops=4 * rows * hidden,
        transcendentals=rows,
        bytes_accessed=rows * hidden * (in_bytes + out_bytes) + hidden * w_bytes,
    )

    kernel = functools.partial(_rmsnorm_kernel, eps=eps)
    out = pl.pallas_call(
        kernel,
        out_shape=jax.ShapeDtypeStruct((rows, hidden), out_dtype),
        grid_spec=pltpu.PrefetchScalarGridSpec(
            num_scalar_prefetch=0,
            grid=grid,
            in_specs=[
                pl.BlockSpec((tile_rows, hidden), lambda i: (i, 0)),
                pl.BlockSpec((1, hidden), lambda i: (0, 0)),
            ],
            out_specs=pl.BlockSpec((tile_rows, hidden), lambda i: (i, 0)),
        ),
        compiler_params=pltpu.CompilerParams(
            dimension_semantics=("parallel",),
            vmem_limit_bytes=vmem_limit,
        ),
        cost_estimate=cost,
    )(x2d, weight.reshape(1, hidden))

    return out.reshape(orig_shape)


def _reference(hidden_states, weight, eps=1e-6):
    input_dtype = hidden_states.dtype
    xf = hidden_states.astype(jnp.float32)
    variance = jnp.mean(xf * xf, axis=-1, keepdims=True)
    xf = xf * jax.lax.rsqrt(variance + eps)
    return weight * xf.astype(input_dtype)


if __name__ == "__main__":
    key = jax.random.PRNGKey(0)

    # Main test: shapes implied by the module forward (rows = batch*seq, hidden last).
    batch, seq, hidden = 2, 8, 32
    x = jax.random.normal(key, (batch, seq, hidden), dtype=jnp.float32)
    weight = jnp.ones((hidden,), dtype=jnp.float32)  # module init uses ones

    out = deepseek_v2_rmsnorm(x, weight, eps=1e-6)
    out = jax.block_until_ready(out)

    ref = _reference(x, weight, eps=1e-6)
    assert out.shape == ref.shape and out.dtype == ref.dtype
    assert jnp.allclose(out, ref, atol=1e-5, rtol=1e-5)

    # Ragged-rows test: rows not divisible by tile_rows exercises the masked last
    # block (padded rows never contaminate real rows — reduction axis is in-bounds).
    x2 = jax.random.normal(jax.random.PRNGKey(1), (4, 5, hidden), dtype=jnp.float32)
    out2 = jax.block_until_ready(deepseek_v2_rmsnorm(x2, weight, eps=1e-6, tile_rows=8))
    ref2 = _reference(x2, weight, eps=1e-6)
    assert out2.shape == ref2.shape and out2.dtype == ref2.dtype
    assert jnp.allclose(out2, ref2, atol=1e-5, rtol=1e-5)

    # Mixed-dtype test: bf16 activations with f32 weight (promoted f32 output), and
    # a multi-step grid to exercise the pipelined path.
    x3 = jax.random.normal(jax.random.PRNGKey(2), (3, 16, hidden), dtype=jnp.bfloat16)
    w3 = jax.random.normal(jax.random.PRNGKey(3), (hidden,), dtype=jnp.float32)
    out3 = jax.block_until_ready(deepseek_v2_rmsnorm(x3, w3, eps=1e-6, tile_rows=16))
    ref3 = _reference(x3, w3, eps=1e-6)
    assert out3.shape == ref3.shape and out3.dtype == ref3.dtype
    assert jnp.allclose(out3, ref3, atol=2e-2, rtol=2e-2)

    print("KERNEL_OK")
</pallas_src>

<mosaic_0001>
module attributes {stable_mosaic.version = 11 : i64} {
  func.func @_rmsnorm_kernel(%arg0: i32, %arg1: memref<16x32xf32, #tpu.memory_space<vmem>>, %arg2: memref<1x32xf32, #tpu.memory_space<vmem>>, %arg3: memref<16x32xf32, #tpu.memory_space<vmem>>) attributes {dimension_semantics = [#tpu.dimension_semantics<parallel>], iteration_bounds = array<i64: 1>, scalar_prefetch = 0 : i64, scratch_operands = 0 : i64, tpu.core_type = #tpu.core_type<tc>, window_params = [{transform_indices = @transform_0, window_bounds = array<i64: 16, 32>}, {pipeline_mode = #tpu.pipeline_mode<synchronous>, transform_indices = @transform_1, window_bounds = array<i64: 1, 32>}, {transform_indices = @transform_2, window_bounds = array<i64: 16, 32>}]} {
    %c0 = arith.constant 0 : index
    %c0_0 = arith.constant 0 : index
    %0 = vector.load %arg1[%c0, %c0_0] : memref<16x32xf32, #tpu.memory_space<vmem>>, vector<16x32xf32>
    %1 = arith.mulf %0, %0 : vector<16x32xf32>
    %cst = arith.constant dense<0.000000e+00> : vector<16xf32>
    %2 = vector.multi_reduction <add>, %1, %cst [1] : vector<16x32xf32> to vector<16xf32>
    %3 = vector.shape_cast %2 : vector<16xf32> to vector<16x1xf32>
    %cst_1 = arith.constant 3.200000e+01 : f32
    %4 = vector.broadcast %cst_1 : f32 to vector<16x1xf32>
    %5 = arith.divf %3, %4 : vector<16x1xf32>
    %cst_2 = arith.constant 9.99999997E-7 : f32
    %6 = vector.broadcast %cst_2 : f32 to vector<16x1xf32>
    %7 = arith.addf %5, %6 : vector<16x1xf32>
    %8 = math.rsqrt %7 : vector<16x1xf32>
    %9 = vector.broadcast %8 : vector<16x1xf32> to vector<16x32xf32>
    %10 = arith.mulf %0, %9 : vector<16x32xf32>
    %c0_3 = arith.constant 0 : index
    %c0_4 = arith.constant 0 : index
    %11 = vector.load %arg2[%c0_3, %c0_4] : memref<1x32xf32, #tpu.memory_space<vmem>>, vector<1x32xf32>
    %12 = vector.broadcast %11 : vector<1x32xf32> to vector<16x32xf32>
    %13 = arith.mulf %12, %10 : vector<16x32xf32>
    %c0_5 = arith.constant 0 : index
    %c0_6 = arith.constant 0 : index
    %14 = vector.load %arg3[%c0_5, %c0_6] : memref<16x32xf32, #tpu.memory_space<vmem>>, vector<16x32xf32>
    tpu.vector_store %arg3[%c0_5, %c0_6], %13 {strides = array<i32>} : memref<16x32xf32, #tpu.memory_space<vmem>>, vector<16x32xf32>,
    return
  }
  func.func @transform_0(%arg0: i32) -> (i32, i32) {
    %c0_i32 = arith.constant 0 : i32
    %c0_i32_0 = arith.constant 0 : i32
    return %arg0, %c0_i32 : i32, i32
  }
  func.func @transform_1(%arg0: i32) -> (i32, i32) {
    %c0_i32 = arith.constant 0 : i32
    %c0_i32_0 = arith.constant 0 : i32
    %c0_i32_1 = arith.constant 0 : i32
    return %c0_i32, %c0_i32_0 : i32, i32
  }
  func.func @transform_2(%arg0: i32) -> (i32, i32) {
    %c0_i32 = arith.constant 0 : i32
    %c0_i32_0 = arith.constant 0 : i32
    return %arg0, %c0_i32 : i32, i32
  }
}

</mosaic_0001>

<llo_original>
// kernel: tpu_custom_call.1
$region0: #{tpu_custom_call.1}
  #allocation0 [shape = 'u32[]', space=smem, size = 0x4, offset = 0x4, fixed_abs, tag = 'smem constant byte address 0x4 - core index']
  #allocation1 [shape = 'u32[144,128]{1,0:T(1,128)}', space=vmem, size = 0x12000, scoped, tag = 'internal scratch']
  %s0 = inlined_call_operand.hbm [shape: f32[16,32], index: 0, kind: input, shape index: {}]
  %s1 = inlined_call_operand.vmem [shape: f32[1,32], index: 1, kind: input, shape index: {}]
  %s2 = inlined_call_operand.hbm [shape: f32[16,32], index: 2, kind: output, shape index: {}]
  %s3 = sld [smem:[#allocation0]]
  $region22: #{tpu_custom_call.1} parent=0
    _
  %s5 = ssub.s32 1, %s3
  %s6 = scalar_select 0, %s5, %s3
  $region1: #{tpu_custom_call.1} parent=0
    #allocation2 [shape = 'u8[8192]{0}', space=vmem, size = 0x2000, scoped, tag = 'input window, operand 0, single buffered']
    #allocation3 [shape = 's32[1]{0}', space=sflag, size = 0x4, scoped, tag = 'scoped memory for tpu_custom_call.1']
    #allocation4 [shape = 's32[1]{0}', space=sflag, size = 0x4, scoped, tag = 'scoped memory for tpu_custom_call.1']
    #allocation5 [shape = 'u8[8192]{0}', space=vmem, size = 0x2000, scoped, tag = 'output window, operand 0, single buffered']
    %7 = vsyncpa [#allocation3], 0
    %8 = vsyncpa [#allocation4], 0
    // Predicated region
    $region2: #{tpu_custom_call.1} parent=1 // pred_check
      _
    $region3: #{tpu_custom_call.1} parent=1 // pred_check_branch
      %10 = sbr.rel (0) target = $region5
    $region4: #{tpu_custom_call.1} parent=1 // pred_region
      %s12 = ssub.s32 256, 256
      %13 = vsyncadd [#allocation3], %s12
      %s14 = sshll.u32 [#allocation2], 4
      %s15 = int_to_ptr.vmem [resolvable:$true] %s14
      %20 = dma.hbm_to_vmem [thread:$0]  %s0, 256, %s15, [#allocation3], 128, 128, 8
    $region5: #{tpu_custom_call.1} parent=1 // pred_fallthru
      _
    // Predicated region
    $region6: #{tpu_custom_call.1} parent=1 // pred_check
      _
    $region7: #{tpu_custom_call.1} parent=1 // pred_check_branch
      %22 = sbr.rel (0) target = $region9
    $region8: #{tpu_custom_call.1} parent=1 // pred_region
      _
    $region9: #{tpu_custom_call.1} parent=1 // pred_fallthru
      _
    // Predicated region
    $region10: #{tpu_custom_call.1} parent=1 // pred_check
      _
    $region11: #{tpu_custom_call.1} parent=1 // pred_check_branch
      %24 = sbr.rel (0) target = $region13
    $region12: #{tpu_custom_call.1} parent=1 // pred_region
      %25 = dma.done [#allocation3], 256
    $region13: #{tpu_custom_call.1} parent=1 // pred_fallthru
      _
    %v26 = vld [vmem:[#allocation2] sm:$0xff]
    %v27 = vld [vmem:[#allocation2 + $0x8] sm:$0xff]
    %v28 = vmul.f32 %v26, %v26
    %v29 = vmul.f32 %v27, %v27
    %vm30 = vcmask 261120
    %v31 = vsel %vm30, %v28, 0.0
    %32 = vadd.xlane.f32.xlu0 %v31
    %v33 = vpop.xlane.xlu0 %32
    %v34 = vsel %vm30, %v29, 0.0
    %35 = vadd.xlane.f32.xlu0 %v34
    %v36 = vpop.xlane.xlu0 %35
    %v37 = vrcp.pop 32.0
    %v38 = vmul.f32 %v33, %v37
    %v39 = vmul.f32 %v36, %v37
    %v40 = vadd.f32 %v38, 1e-06
    %v41 = vadd.f32 %v39, 1e-06
    %v42 = vrsqrt.pop %v40
    %v43 = vrsqrt.pop %v41
    %v44 = vmul.f32 %v26, %v42
    %v45 = vmul.f32 %v27, %v43
    %v46 = vld [vmem:[%s1] sm:$0x1]
    %v48 = vlaneseq
    %v49 = vshrl.u32 %v48, 7
    %v50 = vsub.s32 0, %v49
    %v51 = vrot.slane %v46, %v50
    %v53 = vmul.f32 %v51, %v44
    %v54 = vmul.f32 %v51, %v45
    %55 = vst.msk [vmem:[#allocation5] sm:$0xff] %vm30, %v53
    %56 = vst.msk [vmem:[#allocation5 + $0x8] sm:$0xff] %vm30, %v54
    // Predicated region
    $region14: #{tpu_custom_call.1} parent=1 // pred_check
      _
    $region15: #{tpu_custom_call.1} parent=1 // pred_check_branch
      %58 = sbr.rel (0) target = $region17
    $region16: #{tpu_custom_call.1} parent=1 // pred_region
      %s60 = ssub.s32 256, 256
      %61 = vsyncadd [#allocation4], %s60
      %s62 = sshll.u32 [#allocation5], 4
      %s63 = int_to_ptr.vmem [resolvable:$true] %s62
      %68 = dma.vmem_to_hbm [thread:$0]  %s63, 256, %s2, [#allocation4], 128, 128, 8
    $region17: #{tpu_custom_call.1} parent=1 // pred_fallthru
      _
    // Predicated region
    $region18: #{tpu_custom_call.1} parent=1 // pred_check
      _
    $region19: #{tpu_custom_call.1} parent=1 // pred_check_branch
      %70 = sbr.rel (0) target = $region21
    $region20: #{tpu_custom_call.1} parent=1 // pred_region
      %71 = dma.done [#allocation4], 256
    $region21: #{tpu_custom_call.1} parent=1 // pred_fallthru
      _
    %72 = vsyncpa [#allocation3], 1
    %73 = vsyncpa [#allocation4], 1

</llo_original>
